<compile_context>
chip_gen: v7x
topology: tpu7x:2x2x1
jax: 0.10.0
libtpu: 0.0.40
codegen_flags: <defaults>
</compile_context>

<pallas_src>
import functools

import jax
import jax.numpy as jnp
from jax.experimental import pallas as pl
from jax.experimental.pallas import tpu as pltpu


def _round_up(n, m):
    return ((n + m - 1) // m) * m


def _make_mlp_kernel(num_layers):
    """Fused: x @ W1 + b1 -> ReLU -> ... -> (x @ Wn + bn), no ReLU on last."""

    def kernel(*refs):
        x_ref = refs[0]
        o_ref = refs[-1]
        params = refs[1:-1]  # (w1, b1, w2, b2, ..., wn, bn)

        h = x_ref[...]  # row tile (orig dtype or bf16, see wrapper)
        for i in range(num_layers):
            w = params[2 * i][...]       # bf16 (in_p, out_p), VMEM resident
            b = params[2 * i + 1][...]   # f32  (1, out_p)
            # MXU matmul in bf16 with f32 accumulation.
            acc = jnp.dot(h.astype(w.dtype), w,
                          preferred_element_type=jnp.float32)
            acc = acc + b                        # bias add in f32 (VPU)
            if i < num_layers - 1:
                acc = jnp.maximum(acc, 0.0)      # ReLU (not on last layer)
            h = acc
        o_ref[...] = h.astype(o_ref.dtype)

    return kernel


@functools.partial(jax.jit,
                   static_argnames=("tm", "compute_dtype", "lane_multiple"))
def mlp_forward(x, weights, biases, *, tm=256, compute_dtype=jnp.bfloat16,
                lane_multiple=128):
    """x: (..., input_dim); weights[i]: (in_i, out_i); biases[i]: (out_i,)."""
    orig_dtype = x.dtype
    *lead, in_dim = x.shape
    num_layers = len(weights)
    out_dim = int(weights[-1].shape[1])

    M = 1
    for d in lead:
        M *= d

    # Row tile: large, but never bigger than the (8-rounded) row count; pad M
    # so the grid divides evenly.
    tm_eff = min(tm, _round_up(M, 8))
    M_pad = _round_up(M, tm_eff)

    # Lane-pad every feature dimension to a multiple of 128.
    dims = [in_dim] + [int(w.shape[1]) for w in weights]
    dims_p = [_round_up(d, lane_multiple) for d in dims]

    x2 = x.reshape(M, in_dim)
    if (M_pad != M) or (dims_p[0] != in_dim):
        # Padding forces a rewrite pass over x anyway, so downcast here too:
        # the kernel's HBM read of x is then half-width (bf16).
        x2 = jnp.pad(x2.astype(compute_dtype),
                     ((0, M_pad - M), (0, dims_p[0] - in_dim)))
    # else: pass x untouched (orig dtype); kernel casts per-tile on the VPU.

    inputs = [x2]
    in_specs = [pl.BlockSpec((tm_eff, dims_p[0]), lambda g: (g, 0))]
    for i in range(num_layers):
        wp = jnp.pad(weights[i].astype(compute_dtype),
                     ((0, dims_p[i] - dims[i]),
                      (0, dims_p[i + 1] - dims[i + 1])))
        bp = jnp.pad(biases[i].astype(jnp.float32).reshape(1, -1),
                     ((0, 0), (0, dims_p[i + 1] - dims[i + 1])))
        inputs.extend([wp, bp])
        # Constant index_map -> weights/biases stay resident in VMEM.
        in_specs.append(pl.BlockSpec((dims_p[i], dims_p[i + 1]),
                                     lambda g: (0, 0)))
        in_specs.append(pl.BlockSpec((1, dims_p[i + 1]), lambda g: (0, 0)))

    # Advisory cost hint for the XLA scheduler.
    flops = 2 * M_pad * sum(dims_p[i] * dims_p[i + 1]
                            for i in range(num_layers))
    bytes_accessed = (x2.size * x2.dtype.itemsize
                      + sum(w.size * 2 + b.size * 4
                            for w, b in zip(weights, biases))
                      + M_pad * dims_p[-1] * jnp.dtype(orig_dtype).itemsize)

    out_p = pl.pallas_call(
        _make_mlp_kernel(num_layers),
        out_shape=jax.ShapeDtypeStruct((M_pad, dims_p[-1]), orig_dtype),
        grid_spec=pltpu.PrefetchScalarGridSpec(
            num_scalar_prefetch=0,
            grid=(M_pad // tm_eff,),
            in_specs=in_specs,
            out_specs=pl.BlockSpec((tm_eff, dims_p[-1]), lambda g: (g, 0)),
        ),
        compiler_params=pltpu.CompilerParams(
            dimension_semantics=("parallel",),
            vmem_limit_bytes=64 * 1024 * 1024,  # <= physical on v5e/v6e/v7x
        ),
        cost_estimate=pl.CostEstimate(flops=flops, transcendentals=0,
                                      bytes_accessed=bytes_accessed),
    )(*inputs)

    out = out_p[:M, :out_dim]
    return out.reshape(*lead, out_dim)


def mlp_ref(x, weights, biases):
    """Pure-JAX f32 reference matching the PyTorch MLP forward."""
    h = x
    n = len(weights)
    for i, (w, b) in enumerate(zip(weights, biases)):
        h = h @ w + b
        if i < n - 1:
            h = jax.nn.relu(h)
    return h


if __name__ == "__main__":
    # Small shapes consistent with MLP(input_dim, hidden_dim, output_dim,
    # num_layers), e.g. a DETR/YOLO-style bbox head applied to
    # (batch, seq, input_dim) tokens.
    B, N = 2, 8
    input_dim, hidden_dim, output_dim, num_layers = 32, 64, 4, 3

    key = jax.random.PRNGKey(0)
    keys = jax.random.split(key, 1 + 2 * num_layers)
    x = jax.random.normal(keys[0], (B, N, input_dim), dtype=jnp.float32)

    # Deterministic param init (uniform, PyTorch-Linear-style bounds); weights
    # stored as (in_features, out_features) for the kernel.
    dims = [input_dim] + [hidden_dim] * (num_layers - 1) + [output_dim]
    weights, biases = [], []
    for i in range(num_layers):
        fan_in, fan_out = dims[i], dims[i + 1]
        lim = 1.0 / (fan_in ** 0.5)
        w = jax.random.uniform(keys[1 + 2 * i], (fan_in, fan_out),
                               minval=-lim, maxval=lim, dtype=jnp.float32)
        b = jax.random.uniform(keys[2 + 2 * i], (fan_out,),
                               minval=-lim, maxval=lim, dtype=jnp.float32)
        weights.append(w)
        biases.append(b)

    out = mlp_forward(x, tuple(weights), tuple(biases), tm=256)
    out = jax.block_until_ready(out)

    ref = mlp_ref(x, weights, biases)
    assert out.shape == (B, N, output_dim)
    max_err = float(jnp.max(jnp.abs(out - ref)))
    # bf16 matmul operands with f32 accumulation -> modest tolerance vs f32 ref.
    assert jnp.allclose(out, ref, atol=5e-2, rtol=5e-2), \
        f"mismatch vs reference (max abs err {max_err})"

    print("KERNEL_OK")
</pallas_src>

<mosaic_0001>
module attributes {stable_mosaic.version = 11 : i64} {
  func.func @kernel(%arg0: i32, %arg1: memref<16x128xbf16, #tpu.memory_space<vmem>>, %arg2: memref<128x128xbf16, #tpu.memory_space<vmem>>, %arg3: memref<1x128xf32, #tpu.memory_space<vmem>>, %arg4: memref<128x128xbf16, #tpu.memory_space<vmem>>, %arg5: memref<1x128xf32, #tpu.memory_space<vmem>>, %arg6: memref<128x128xbf16, #tpu.memory_space<vmem>>, %arg7: memref<1x128xf32, #tpu.memory_space<vmem>>, %arg8: memref<16x128xf32, #tpu.memory_space<vmem>>) attributes {dimension_semantics = [#tpu.dimension_semantics<parallel>], iteration_bounds = array<i64: 1>, scalar_prefetch = 0 : i64, scratch_operands = 0 : i64, tpu.core_type = #tpu.core_type<tc>, window_params = [{transform_indices = @transform_0, window_bounds = array<i64: 16, 128>}, {pipeline_mode = #tpu.pipeline_mode<synchronous>, transform_indices = @transform_1, window_bounds = array<i64: 128, 128>}, {pipeline_mode = #tpu.pipeline_mode<synchronous>, transform_indices = @transform_2, window_bounds = array<i64: 1, 128>}, {pipeline_mode = #tpu.pipeline_mode<synchronous>, transform_indices = @transform_3, window_bounds = array<i64: 128, 128>}, {pipeline_mode = #tpu.pipeline_mode<synchronous>, transform_indices = @transform_4, window_bounds = array<i64: 1, 128>}, {pipeline_mode = #tpu.pipeline_mode<synchronous>, transform_indices = @transform_5, window_bounds = array<i64: 128, 128>}, {pipeline_mode = #tpu.pipeline_mode<synchronous>, transform_indices = @transform_6, window_bounds = array<i64: 1, 128>}, {transform_indices = @transform_7, window_bounds = array<i64: 16, 128>}]} {
    %c0 = arith.constant 0 : index
    %c0_0 = arith.constant 0 : index
    %0 = vector.load %arg1[%c0, %c0_0] : memref<16x128xbf16, #tpu.memory_space<vmem>>, vector<16x128xbf16>
    %c0_1 = arith.constant 0 : index
    %c0_2 = arith.constant 0 : index
    %1 = vector.load %arg2[%c0_1, %c0_2] : memref<128x128xbf16, #tpu.memory_space<vmem>>, vector<128x128xbf16>
    %c0_3 = arith.constant 0 : index
    %c0_4 = arith.constant 0 : index
    %2 = vector.load %arg3[%c0_3, %c0_4] : memref<1x128xf32, #tpu.memory_space<vmem>>, vector<1x128xf32>
    %cst = arith.constant dense<0.000000e+00> : vector<16x128xf32>
    %3 = tpu.matmul %0, %1, %cst {dimension_numbers = #tpu.dot_dimension_numbers<[1], [0], [0], [1], [0, 0, 1, 1], [], []>} : vector<16x128xbf16>, vector<128x128xbf16>, vector<16x128xf32> -> vector<16x128xf32>
    %4 = vector.broadcast %2 : vector<1x128xf32> to vector<16x128xf32>
    %5 = arith.addf %3, %4 : vector<16x128xf32>
    %cst_5 = arith.constant 0.000000e+00 : f32
    %6 = vector.broadcast %cst_5 : f32 to vector<16x128xf32>
    %7 = arith.maximumf %5, %6 : vector<16x128xf32>
    %c0_6 = arith.constant 0 : index
    %c0_7 = arith.constant 0 : index
    %8 = vector.load %arg4[%c0_6, %c0_7] : memref<128x128xbf16, #tpu.memory_space<vmem>>, vector<128x128xbf16>
    %c0_8 = arith.constant 0 : index
    %c0_9 = arith.constant 0 : index
    %9 = vector.load %arg5[%c0_8, %c0_9] : memref<1x128xf32, #tpu.memory_space<vmem>>, vector<1x128xf32>
    %10 = arith.truncf %7 : vector<16x128xf32> to vector<16x128xbf16>
    %cst_10 = arith.constant dense<0.000000e+00> : vector<16x128xf32>
    %11 = tpu.matmul %10, %8, %cst_10 {dimension_numbers = #tpu.dot_dimension_numbers<[1], [0], [0], [1], [0, 0, 1, 1], [], []>} : vector<16x128xbf16>, vector<128x128xbf16>, vector<16x128xf32> -> vector<16x128xf32>
    %12 = vector.broadcast %9 : vector<1x128xf32> to vector<16x128xf32>
    %13 = arith.addf %11, %12 : vector<16x128xf32>
    %cst_11 = arith.constant 0.000000e+00 : f32
    %14 = vector.broadcast %cst_11 : f32 to vector<16x128xf32>
    %15 = arith.maximumf %13, %14 : vector<16x128xf32>
    %c0_12 = arith.constant 0 : index
    %c0_13 = arith.constant 0 : index
    %16 = vector.load %arg6[%c0_12, %c0_13] : memref<128x128xbf16, #tpu.memory_space<vmem>>, vector<128x128xbf16>
    %c0_14 = arith.constant 0 : index
    %c0_15 = arith.constant 0 : index
    %17 = vector.load %arg7[%c0_14, %c0_15] : memref<1x128xf32, #tpu.memory_space<vmem>>, vector<1x128xf32>
    %18 = arith.truncf %15 : vector<16x128xf32> to vector<16x128xbf16>
    %cst_16 = arith.constant dense<0.000000e+00> : vector<16x128xf32>
    %19 = tpu.matmul %18, %16, %cst_16 {dimension_numbers = #tpu.dot_dimension_numbers<[1], [0], [0], [1], [0, 0, 1, 1], [], []>} : vector<16x128xbf16>, vector<128x128xbf16>, vector<16x128xf32> -> vector<16x128xf32>
    %20 = vector.broadcast %17 : vector<1x128xf32> to vector<16x128xf32>
    %21 = arith.addf %19, %20 : vector<16x128xf32>
    %c0_17 = arith.constant 0 : index
    %c0_18 = arith.constant 0 : index
    %22 = vector.load %arg8[%c0_17, %c0_18] : memref<16x128xf32, #tpu.memory_space<vmem>>, vector<16x128xf32>
    tpu.vector_store %arg8[%c0_17, %c0_18], %21 {strides = array<i32>} : memref<16x128xf32, #tpu.memory_space<vmem>>, vector<16x128xf32>,
    return
  }
  func.func @transform_0(%arg0: i32) -> (i32, i32) {
    %c0_i32 = arith.constant 0 : i32
    %c0_i32_0 = arith.constant 0 : i32
    return %arg0, %c0_i32 : i32, i32
  }
  func.func @transform_1(%arg0: i32) -> (i32, i32) {
    %c0_i32 = arith.constant 0 : i32
    %c0_i32_0 = arith.constant 0 : i32
    %c0_i32_1 = arith.constant 0 : i32
    return %c0_i32, %c0_i32_0 : i32, i32
  }
  func.func @transform_2(%arg0: i32) -> (i32, i32) {
    %c0_i32 = arith.constant 0 : i32
    %c0_i32_0 = arith.constant 0 : i32
    %c0_i32_1 = arith.constant 0 : i32
    return %c0_i32, %c0_i32_0 : i32, i32
  }
  func.func @transform_3(%arg0: i32) -> (i32, i32) {
    %c0_i32 = arith.constant 0 : i32
    %c0_i32_0 = arith.constant 0 : i32
    %c0_i32_1 = arith.constant 0 : i32
    return %c0_i32, %c0_i32_0 : i32, i32
  }
  func.func @transform_4(%arg0: i32) -> (i32, i32) {
    %c0_i32 = arith.constant 0 : i32
    %c0_i32_0 = arith.constant 0 : i32
    %c0_i32_1 = arith.constant 0 : i32
    return %c0_i32, %c0_i32_0 : i32, i32
  }
  func.func @transform_5(%arg0: i32) -> (i32, i32) {
    %c0_i32 = arith.constant 0 : i32
    %c0_i32_0 = arith.constant 0 : i32
    %c0_i32_1 = arith.constant 0 : i32
    return %c0_i32, %c0_i32_0 : i32, i32
  }
  func.func @transform_6(%arg0: i32) -> (i32, i32) {
    %c0_i32 = arith.constant 0 : i32
    %c0_i32_0 = arith.constant 0 : i32
    %c0_i32_1 = arith.constant 0 : i32
    return %c0_i32, %c0_i32_0 : i32, i32
  }
  func.func @transform_7(%arg0: i32) -> (i32, i32) {
    %c0_i32 = arith.constant 0 : i32
    %c0_i32_0 = arith.constant 0 : i32
    return %arg0, %c0_i32 : i32, i32
  }
}

</mosaic_0001>

<llo_original>
// kernel: mlp_forward.1
$region0: #{mlp_forward.1}
  #allocation0 [shape = 'u32[]', space=smem, size = 0x4, offset = 0x4, fixed_abs, tag = 'smem constant byte address 0x4 - core index']
  #allocation1 [shape = 'u32[144,128]{1,0:T(1,128)}', space=vmem, size = 0x12000, scoped, tag = 'internal scratch']
  %s0 = inlined_call_operand.hbm [shape: bf16[16,128], index: 0, kind: input, shape index: {}]
  %s1 = inlined_call_operand.hbm [shape: bf16[128,128], index: 1, kind: input, shape index: {}]
  %s2 = inlined_call_operand.hbm [shape: f32[1,128], index: 2, kind: input, shape index: {}]
  %s3 = inlined_call_operand.hbm [shape: bf16[128,128], index: 3, kind: input, shape index: {}]
  %s4 = inlined_call_operand.hbm [shape: f32[1,128], index: 4, kind: input, shape index: {}]
  %s5 = inlined_call_operand.hbm [shape: bf16[128,128], index: 5, kind: input, shape index: {}]
  %s6 = inlined_call_operand.hbm [shape: f32[1,128], index: 6, kind: input, shape index: {}]
  %s7 = inlined_call_operand.hbm [shape: f32[16,128], index: 7, kind: output, shape index: {}]
  %s8 = sld [smem:[#allocation0]]
  $region66: #{mlp_forward.1} parent=0
    _
  %s10 = ssub.s32 1, %s8
  %s11 = scalar_select 0, %s10, %s8
  $region1: #{mlp_forward.1} parent=0
    #allocation2 [shape = 'u8[4096]{0}', space=vmem, size = 0x1000, scoped, tag = 'input window, operand 0, single buffered']
    #allocation3 [shape = 's32[1]{0}', space=sflag, size = 0x4, scoped, tag = 'scoped memory for mlp_forward.1']
    #allocation4 [shape = 's32[1]{0}', space=sflag, size = 0x4, scoped, tag = 'scoped memory for mlp_forward.1']
    #allocation5 [shape = 'u8[32768]{0}', space=vmem, size = 0x8000, scoped, tag = 'input window, operand 1, single buffered']
    #allocation6 [shape = 's32[1]{0}', space=sflag, size = 0x4, scoped, tag = 'scoped memory for mlp_forward.1']
    #allocation7 [shape = 'u8[512]{0}', space=vmem, size = 0x400, scoped, tag = 'input window, operand 2, single buffered']
    #allocation8 [shape = 'u8[32768]{0}', space=vmem, size = 0x8000, scoped, tag = 'input window, operand 3, single buffered']
    #allocation9 [shape = 's32[1]{0}', space=sflag, size = 0x4, scoped, tag = 'scoped memory for mlp_forward.1']
    #allocation10 [shape = 'u8[512]{0}', space=vmem, size = 0x400, scoped, tag = 'input window, operand 4, single buffered']
    #allocation11 [shape = 'u8[32768]{0}', space=vmem, size = 0x8000, scoped, tag = 'input window, operand 5, single buffered']
    #allocation12 [shape = 's32[1]{0}', space=sflag, size = 0x4, scoped, tag = 'scoped memory for mlp_forward.1']
    #allocation13 [shape = 'u8[512]{0}', space=vmem, size = 0x400, scoped, tag = 'input window, operand 6, single buffered']
    #allocation14 [shape = 'u8[8192]{0}', space=vmem, size = 0x2000, scoped, tag = 'output window, operand 0, single buffered']
    %12 = vsyncpa [#allocation3], 0
    %13 = vsyncpa [#allocation6], 0
    %14 = vsyncpa [#allocation9], 0
    %15 = vsyncpa [#allocation12], 0
    %16 = vsyncpa [#allocation4], 0
    // Predicated region
    $region2: #{mlp_forward.1} parent=1 // pred_check
      _
    $region3: #{mlp_forward.1} parent=1 // pred_check_branch
      %18 = sbr.rel (0) target = $region5
    $region4: #{mlp_forward.1} parent=1 // pred_region
      %s20 = ssub.s32 128, 128
      %21 = vsyncadd [#allocation3], %s20
      %s22 = sshll.u32 [#allocation2], 4
      %s23 = int_to_ptr.vmem [resolvable:$true] %s22
      %28 = dma.hbm_to_vmem [thread:$0]  %s0, 128, %s23, [#allocation3], 64, 64, 4
    $region5: #{mlp_forward.1} parent=1 // pred_fallthru
      _
    // Predicated region
    $region6: #{mlp_forward.1} parent=1 // pred_check
      _
    $region7: #{mlp_forward.1} parent=1 // pred_check_branch
      %30 = sbr.rel (0) target = $region9
    $region8: #{mlp_forward.1} parent=1 // pred_region
      %s32 = ssub.s32 1024, 1024
      %33 = vsyncadd [#allocation6], %s32
      %s34 = sshll.u32 [#allocation5], 4
      %s35 = int_to_ptr.vmem [resolvable:$true] %s34
      %40 = dma.hbm_to_vmem [thread:$0]  %s1, 1024, %s35, [#allocation6], 64, 64, 4
    $region9: #{mlp_forward.1} parent=1 // pred_fallthru
      _
    // Predicated region
    $region10: #{mlp_forward.1} parent=1 // pred_check
      _
    $region11: #{mlp_forward.1} parent=1 // pred_check_branch
      %42 = sbr.rel (0) target = $region13
    $region12: #{mlp_forward.1} parent=1 // pred_region
      %s44 = ssub.s32 16, 16
      %45 = vsyncadd [#allocation6], %s44
      %s47 = sshll.u32 [#allocation7], 4
      %s48 = int_to_ptr.vmem [resolvable:$true] %s47
      %50 = dma.hbm_to_vmem [thread:$0]  %s2, 16, %s48, [#allocation6]
    $region13: #{mlp_forward.1} parent=1 // pred_fallthru
      _
    // Predicated region
    $region14: #{mlp_forward.1} parent=1 // pred_check
      _
    $region15: #{mlp_forward.1} parent=1 // pred_check_branch
      %52 = sbr.rel (0) target = $region17
    $region16: #{mlp_forward.1} parent=1 // pred_region
      %s54 = ssub.s32 1024, 1024
      %55 = vsyncadd [#allocation9], %s54
      %s56 = sshll.u32 [#allocation8], 4
      %s57 = int_to_ptr.vmem [resolvable:$true] %s56
      %62 = dma.hbm_to_vmem [thread:$0]  %s3, 1024, %s57, [#allocation9], 64, 64, 4
    $region17: #{mlp_forward.1} parent=1 // pred_fallthru
      _
    // Predicated region
    $region18: #{mlp_forward.1} parent=1 // pred_check
      _
    $region19: #{mlp_forward.1} parent=1 // pred_check_branch
      %64 = sbr.rel (0) target = $region21
    $region20: #{mlp_forward.1} parent=1 // pred_region
      %s66 = ssub.s32 16, 16
      %67 = vsyncadd [#allocation9], %s66
      %s69 = sshll.u32 [#allocation10], 4
      %s70 = int_to_ptr.vmem [resolvable:$true] %s69
      %72 = dma.hbm_to_vmem [thread:$0]  %s4, 16, %s70, [#allocation9]
    $region21: #{mlp_forward.1} parent=1 // pred_fallthru
      _
    // Predicated region
    $region22: #{mlp_forward.1} parent=1 // pred_check
      _
    $region23: #{mlp_forward.1} parent=1 // pred_check_branch
      %74 = sbr.rel (0) target = $region25
    $region24: #{mlp_forward.1} parent=1 // pred_region
      %s76 = ssub.s32 1024, 1024
      %77 = vsyncadd [#allocation12], %s76
      %s78 = sshll.u32 [#allocation11], 4
      %s79 = int_to_ptr.vmem [resolvable:$true] %s78
      %84 = dma.hbm_to_vmem [thread:$0]  %s5, 1024, %s79, [#allocation12], 64, 64, 4
    $region25: #{mlp_forward.1} parent=1 // pred_fallthru
      _
    // Predicated region
    $region26: #{mlp_forward.1} parent=1 // pred_check
      _
    $region27: #{mlp_forward.1} parent=1 // pred_check_branch
      %86 = sbr.rel (0) target = $region29
    $region28: #{mlp_forward.1} parent=1 // pred_region
      %s88 = ssub.s32 16, 16
      %89 = vsyncadd [#allocation12], %s88
      %s91 = sshll.u32 [#allocation13], 4
      %s92 = int_to_ptr.vmem [resolvable:$true] %s91
      %94 = dma.hbm_to_vmem [thread:$0]  %s6, 16, %s92, [#allocation12]
    $region29: #{mlp_forward.1} parent=1 // pred_fallthru
      _
    // Predicated region
    $region30: #{mlp_forward.1} parent=1 // pred_check
      _
    $region31: #{mlp_forward.1} parent=1 // pred_check_branch
      %96 = sbr.rel (0) target = $region33
    $region32: #{mlp_forward.1} parent=1 // pred_region
      %97 = dma.done [#allocation3], 128
    $region33: #{mlp_forward.1} parent=1 // pred_fallthru
      _
    // Predicated region
    $region34: #{mlp_forward.1} parent=1 // pred_check
      _
    $region35: #{mlp_forward.1} parent=1 // pred_check_branch
      %99 = sbr.rel (0) target = $region37
    $region36: #{mlp_forward.1} parent=1 // pred_region
      %100 = dma.done [#allocation6], 1024
    $region37: #{mlp_forward.1} parent=1 // pred_fallthru
      _
    // Predicated region
    $region38: #{mlp_forward.1} parent=1 // pred_check
      _
    $region39: #{mlp_forward.1} parent=1 // pred_check_branch
      %102 = sbr.rel (0) target = $region41
    $region40: #{mlp_forward.1} parent=1 // pred_region
      %103 = dma.done [#allocation6], 16
    $region41: #{mlp_forward.1} parent=1 // pred_fallthru
      _
    // Predicated region
    $region42: #{mlp_forward.1} parent=1 // pred_check
      _
    $region43: #{mlp_forward.1} parent=1 // pred_check_branch
      %105 = sbr.rel (0) target = $region45
    $region44: #{mlp_forward.1} parent=1 // pred_region
      %106 = dma.done [#allocation9], 1024
    $region45: #{mlp_forward.1} parent=1 // pred_fallthru
      _
    // Predicated region
    $region46: #{mlp_forward.1} parent=1 // pred_check
      _
    $region47: #{mlp_forward.1} parent=1 // pred_check_branch
      %108 = sbr.rel (0) target = $region49
    $region48: #{mlp_forward.1} parent=1 // pred_region
      %109 = dma.done [#allocation9], 16
    $region49: #{mlp_forward.1} parent=1 // pred_fallthru
      _
    // Predicated region
    $region50: #{mlp_forward.1} parent=1 // pred_check
      _
    $region51: #{mlp_forward.1} parent=1 // pred_check_branch
      %111 = sbr.rel (0) target = $region53
    $region52: #{mlp_forward.1} parent=1 // pred_region
      %112 = dma.done [#allocation12], 1024
    $region53: #{mlp_forward.1} parent=1 // pred_fallthru
      _
    // Predicated region
    $region54: #{mlp_forward.1} parent=1 // pred_check
      _
    $region55: #{mlp_forward.1} parent=1 // pred_check_branch
      %114 = sbr.rel (0) target = $region57
    $region56: #{mlp_forward.1} parent=1 // pred_region
      %115 = dma.done [#allocation12], 16
    $region57: #{mlp_forward.1} parent=1 // pred_fallthru
      _
    %v117 = vld [vmem:[#allocation2] sm:$0xf]
    %v118 = vld [vmem:[#allocation2 + $0x4] sm:$0xf]
    %v119 = vld [vmem:[#allocation5] sm:$0xf]
    %v120 = vld [vmem:[#allocation5 + $0x4] sm:$0xf]
    %v121 = vld [vmem:[#allocation5 + $0x8] sm:$0xf]
    %v122 = vld [vmem:[#allocation5 + $0xc] sm:$0xf]
    %v123 = vld [vmem:[#allocation5 + $0x10] sm:$0xf]
    %v124 = vld [vmem:[#allocation5 + $0x14] sm:$0xf]
    %v125 = vld [vmem:[#allocation5 + $0x18] sm:$0xf]
    %v126 = vld [vmem:[#allocation5 + $0x1c] sm:$0xf]
    %v127 = vld [vmem:[#allocation5 + $0x20] sm:$0xf]
    %v128 = vld [vmem:[#allocation5 + $0x24] sm:$0xf]
    %v129 = vld [vmem:[#allocation5 + $0x28] sm:$0xf]
    %v130 = vld [vmem:[#allocation5 + $0x2c] sm:$0xf]
    %v131 = vld [vmem:[#allocation5 + $0x30] sm:$0xf]
    %v132 = vld [vmem:[#allocation5 + $0x34] sm:$0xf]
    %v133 = vld [vmem:[#allocation5 + $0x38] sm:$0xf]
    %v134 = vld [vmem:[#allocation5 + $0x3c] sm:$0xf]
    %v135 = vld [vmem:[#allocation7] sm:$0x1]
    %v137 = vlaneseq
    %v138 = vshrl.u32 %v137, 7
    %v139 = vsub.s32 0, %v138
    %v140 = vrot.slane %v135, %v139
    %v144 = vunpack.c.l.b16 %v117
    %v145 = vunpack.c.l.b16 %v118
    %v146 = vpack.c.b16 %v145, %v144
    %v164 = vunpack.c.l.b16 %v119
    %v165 = vunpack.c.l.b16 %v120
    %v166 = vunpack.c.l.b16 %v121
    %v167 = vunpack.c.l.b16 %v122
    %v168 = vunpack.c.l.b16 %v123
    %v169 = vunpack.c.l.b16 %v124
    %v170 = vunpack.c.l.b16 %v125
    %v171 = vunpack.c.l.b16 %v126
    %v172 = vunpack.c.l.b16 %v127
    %v173 = vunpack.c.l.b16 %v128
    %v174 = vunpack.c.l.b16 %v129
    %v175 = vunpack.c.l.b16 %v130
    %v176 = vunpack.c.l.b16 %v131
    %v177 = vunpack.c.l.b16 %v132
    %v178 = vunpack.c.l.b16 %v133
    %v179 = vunpack.c.l.b16 %v134
    %v180 = vpack.c.b16 %v165, %v164
    %v181 = vpack.c.b16 %v167, %v166
    %v182 = vpack.c.b16 %v169, %v168
    %v183 = vpack.c.b16 %v171, %v170
    %v184 = vpack.c.b16 %v173, %v172
    %v185 = vpack.c.b16 %v175, %v174
    %v186 = vpack.c.b16 %v177, %v176
    %v187 = vpack.c.b16 %v179, %v178
    %196 = vmatprep.subr.bf16.mxu0 0
    %197 = vmatpush1.bf16.msra.mxu0 %v180
    %198 = vmatprep.subr.bf16.mxu0 0
    %199 = vmatpush1.bf16.msra.mxu0 %v181
    %200 = vmatprep.subr.bf16.mxu0 0
    %201 = vmatpush1.bf16.msra.mxu0 %v182
    %202 = vmatprep.subr.bf16.mxu0 0
    %203 = vmatpush1.bf16.msra.mxu0 %v183
    %204 = vmatprep.subr.bf16.mxu0 0
    %205 = vmatpush1.bf16.msra.mxu0 %v184
    %206 = vmatprep.subr.bf16.mxu0 0
    %207 = vmatpush1.bf16.msra.mxu0 %v185
    %208 = vmatprep.subr.bf16.mxu0 0
    %209 = vmatpush1.bf16.msra.mxu0 %v186
    %210 = vmatprep.subr.bf16.mxu0 0
    %211 = vmatpush1.bf16.msra.mxu0 %v187
    %212 = vmatprep.subr.bf16.mxu0 0
    %213 = vmatpush1.bf16.msra.mxu0 0
    %214 = vmatprep.subr.bf16.mxu0 0
    %215 = vmatpush1.bf16.msra.mxu0 0
    %216 = vmatprep.subr.bf16.mxu0 0
    %217 = vmatpush1.bf16.msra.mxu0 0
    %218 = vmatprep.subr.bf16.mxu0 0
    %219 = vmatpush1.bf16.msra.mxu0 0
    %220 = vmatprep.subr.bf16.mxu0 0
    %221 = vmatpush1.bf16.msra.mxu0 0
    %222 = vmatprep.subr.bf16.mxu0 0
    %223 = vmatpush1.bf16.msra.mxu0 0
    %224 = vmatprep.subr.bf16.mxu0 0
    %225 = vmatpush1.bf16.msra.mxu0 0
    %226 = vmatprep.subr.bf16.mxu0 0
    %227 = vmatpush1.bf16.msra.mxu0 0
    %228 = vmatprep.mubr.bf16.mxu0 0
    %229 = vmatmul.mubr.bf16.gmra.mrb[0].mxu0 %v146
    %v230 = vpop.f32.mrb[0].mxu0
    %v231 = vadd.f32 %v140, %v230
    %v232 = vpop.f32.mrb[0].mxu0
    %v233 = vpop.f32.mrb[0].mxu0
    %v234 = vadd.f32 %v140, %v233
    %v235 = vpop.f32.mrb[0].mxu0
    %236 = vdwg.mxu0
    %v237 = vmax.f32 %v231, 0.0
    %v238 = vmax.f32 %v234, 0.0
    %v239 = vld [vmem:[#allocation8] sm:$0xf]
    %v240 = vld [vmem:[#allocation8 + $0x4] sm:$0xf]
    %v241 = vld [vmem:[#allocation8 + $0x8] sm:$0xf]
    %v242 = vld [vmem:[#allocation8 + $0xc] sm:$0xf]
    %v243 = vld [vmem:[#allocation8 + $0x10] sm:$0xf]
    %v244 = vld [vmem:[#allocation8 + $0x14] sm:$0xf]
    %v245 = vld [vmem:[#allocation8 + $0x18] sm:$0xf]
    %v246 = vld [vmem:[#allocation8 + $0x1c] sm:$0xf]
    %v247 = vld [vmem:[#allocation8 + $0x20] sm:$0xf]
    %v248 = vld [vmem:[#allocation8 + $0x24] sm:$0xf]
    %v249 = vld [vmem:[#allocation8 + $0x28] sm:$0xf]
    %v250 = vld [vmem:[#allocation8 + $0x2c] sm:$0xf]
    %v251 = vld [vmem:[#allocation8 + $0x30] sm:$0xf]
    %v252 = vld [vmem:[#allocation8 + $0x34] sm:$0xf]
    %v253 = vld [vmem:[#allocation8 + $0x38] sm:$0xf]
    %v254 = vld [vmem:[#allocation8 + $0x3c] sm:$0xf]
    %v255 = vld [vmem:[#allocation10] sm:$0x1]
    %v256 = vpack.c.bf16 %v238, %v237
    %v258 = vlaneseq
    %v259 = vshrl.u32 %v258, 7
    %v260 = vsub.s32 0, %v259
    %v261 = vrot.slane %v255, %v260
    %v279 = vunpack.c.l.b16 %v239
    %v280 = vunpack.c.l.b16 %v240
    %v281 = vunpack.c.l.b16 %v241
    %v282 = vunpack.c.l.b16 %v242
    %v283 = vunpack.c.l.b16 %v243
    %v284 = vunpack.c.l.b16 %v244
    %v285 = vunpack.c.l.b16 %v245
    %v286 = vunpack.c.l.b16 %v246
    %v287 = vunpack.c.l.b16 %v247
    %v288 = vunpack.c.l.b16 %v248
    %v289 = vunpack.c.l.b16 %v249
    %v290 = vunpack.c.l.b16 %v250
    %v291 = vunpack.c.l.b16 %v251
    %v292 = vunpack.c.l.b16 %v252
    %v293 = vunpack.c.l.b16 %v253
    %v294 = vunpack.c.l.b16 %v254
    %v295 = vpack.c.b16 %v280, %v279
    %v296 = vpack.c.b16 %v282, %v281
    %v297 = vpack.c.b16 %v284, %v283
    %v298 = vpack.c.b16 %v286, %v285
    %v299 = vpack.c.b16 %v288, %v287
    %v300 = vpack.c.b16 %v290, %v289
    %v301 = vpack.c.b16 %v292, %v291
    %v302 = vpack.c.b16 %v294, %v293
    %311 = vmatprep.subr.bf16.mxu0 0
    %312 = vmatpush1.bf16.msra.mxu0 %v295
    %313 = vmatprep.subr.bf16.mxu0 0
    %314 = vmatpush1.bf16.msra.mxu0 %v296
    %315 = vmatprep.subr.bf16.mxu0 0
    %316 = vmatpush1.bf16.msra.mxu0 %v297
    %317 = vmatprep.subr.bf16.mxu0 0
    %318 = vmatpush1.bf16.msra.mxu0 %v298
    %319 = vmatprep.subr.bf16.mxu0 0
    %320 = vmatpush1.bf16.msra.mxu0 %v299
    %321 = vmatprep.subr.bf16.mxu0 0
    %322 = vmatpush1.bf16.msra.mxu0 %v300
    %323 = vmatprep.subr.bf16.mxu0 0
    %324 = vmatpush1.bf16.msra.mxu0 %v301
    %325 = vmatprep.subr.bf16.mxu0 0
    %326 = vmatpush1.bf16.msra.mxu0 %v302
    %327 = vmatprep.subr.bf16.mxu0 0
    %328 = vmatpush1.bf16.msra.mxu0 0
    %329 = vmatprep.subr.bf16.mxu0 0
    %330 = vmatpush1.bf16.msra.mxu0 0
    %331 = vmatprep.subr.bf16.mxu0 0
    %332 = vmatpush1.bf16.msra.mxu0 0
    %333 = vmatprep.subr.bf16.mxu0 0
    %334 = vmatpush1.bf16.msra.mxu0 0
    %335 = vmatprep.subr.bf16.mxu0 0
    %336 = vmatpush1.bf16.msra.mxu0 0
    %337 = vmatprep.subr.bf16.mxu0 0
    %338 = vmatpush1.bf16.msra.mxu0 0
    %339 = vmatprep.subr.bf16.mxu0 0
    %340 = vmatpush1.bf16.msra.mxu0 0
    %341 = vmatprep.subr.bf16.mxu0 0
    %342 = vmatpush1.bf16.msra.mxu0 0
    %343 = vmatprep.mubr.bf16.mxu0 0
    %344 = vmatmul.mubr.bf16.gmra.mrb[0].mxu0 %v256
    %v345 = vpop.f32.mrb[0].mxu0
    %v346 = vadd.f32 %v261, %v345
    %v347 = vpop.f32.mrb[0].mxu0
    %v348 = vpop.f32.mrb[0].mxu0
    %v349 = vadd.f32 %v261, %v348
    %v350 = vpop.f32.mrb[0].mxu0
    %351 = vdwg.mxu0
    %v352 = vmax.f32 %v346, 0.0
    %v353 = vmax.f32 %v349, 0.0
    %v354 = vld [vmem:[#allocation11] sm:$0xf]
    %v355 = vld [vmem:[#allocation11 + $0x4] sm:$0xf]
    %v356 = vld [vmem:[#allocation11 + $0x8] sm:$0xf]
    %v357 = vld [vmem:[#allocation11 + $0xc] sm:$0xf]
    %v358 = vld [vmem:[#allocation11 + $0x10] sm:$0xf]
    %v359 = vld [vmem:[#allocation11 + $0x14] sm:$0xf]
    %v360 = vld [vmem:[#allocation11 + $0x18] sm:$0xf]
    %v361 = vld [vmem:[#allocation11 + $0x1c] sm:$0xf]
    %v362 = vld [vmem:[#allocation11 + $0x20] sm:$0xf]
    %v363 = vld [vmem:[#allocation11 + $0x24] sm:$0xf]
    %v364 = vld [vmem:[#allocation11 + $0x28] sm:$0xf]
    %v365 = vld [vmem:[#allocation11 + $0x2c] sm:$0xf]
    %v366 = vld [vmem:[#allocation11 + $0x30] sm:$0xf]
    %v367 = vld [vmem:[#allocation11 + $0x34] sm:$0xf]
    %v368 = vld [vmem:[#allocation11 + $0x38] sm:$0xf]
    %v369 = vld [vmem:[#allocation11 + $0x3c] sm:$0xf]
    %v370 = vld [vmem:[#allocation13] sm:$0x1]
    %v371 = vpack.c.bf16 %v353, %v352
    %v373 = vlaneseq
    %v374 = vshrl.u32 %v373, 7
    %v375 = vsub.s32 0, %v374
    %v376 = vrot.slane %v370, %v375
    %v394 = vunpack.c.l.b16 %v354
    %v395 = vunpack.c.l.b16 %v355
    %v396 = vunpack.c.l.b16 %v356
    %v397 = vunpack.c.l.b16 %v357
    %v398 = vunpack.c.l.b16 %v358
    %v399 = vunpack.c.l.b16 %v359
    %v400 = vunpack.c.l.b16 %v360
    %v401 = vunpack.c.l.b16 %v361
    %v402 = vunpack.c.l.b16 %v362
    %v403 = vunpack.c.l.b16 %v363
    %v404 = vunpack.c.l.b16 %v364
    %v405 = vunpack.c.l.b16 %v365
    %v406 = vunpack.c.l.b16 %v366
    %v407 = vunpack.c.l.b16 %v367
    %v408 = vunpack.c.l.b16 %v368
    %v409 = vunpack.c.l.b16 %v369
    %v410 = vpack.c.b16 %v395, %v394
    %v411 = vpack.c.b16 %v397, %v396
    %v412 = vpack.c.b16 %v399, %v398
    %v413 = vpack.c.b16 %v401, %v400
    %v414 = vpack.c.b16 %v403, %v402
    %v415 = vpack.c.b16 %v405, %v404
    %v416 = vpack.c.b16 %v407, %v406
    %v417 = vpack.c.b16 %v409, %v408
    %426 = vmatprep.subr.bf16.mxu0 0
    %427 = vmatpush1.bf16.msra.mxu0 %v410
    %428 = vmatprep.subr.bf16.mxu0 0
    %429 = vmatpush1.bf16.msra.mxu0 %v411
    %430 = vmatprep.subr.bf16.mxu0 0
    %431 = vmatpush1.bf16.msra.mxu0 %v412
    %432 = vmatprep.subr.bf16.mxu0 0
    %433 = vmatpush1.bf16.msra.mxu0 %v413
    %434 = vmatprep.subr.bf16.mxu0 0
    %435 = vmatpush1.bf16.msra.mxu0 %v414
    %436 = vmatprep.subr.bf16.mxu0 0
    %437 = vmatpush1.bf16.msra.mxu0 %v415
    %438 = vmatprep.subr.bf16.mxu0 0
    %439 = vmatpush1.bf16.msra.mxu0 %v416
    %440 = vmatprep.subr.bf16.mxu0 0
    %441 = vmatpush1.bf16.msra.mxu0 %v417
    %442 = vmatprep.subr.bf16.mxu0 0
    %443 = vmatpush1.bf16.msra.mxu0 0
    %444 = vmatprep.subr.bf16.mxu0 0
    %445 = vmatpush1.bf16.msra.mxu0 0
    %446 = vmatprep.subr.bf16.mxu0 0
    %447 = vmatpush1.bf16.msra.mxu0 0
    %448 = vmatprep.subr.bf16.mxu0 0
    %449 = vmatpush1.bf16.msra.mxu0 0
    %450 = vmatprep.subr.bf16.mxu0 0
    %451 = vmatpush1.bf16.msra.mxu0 0
    %452 = vmatprep.subr.bf16.mxu0 0
    %453 = vmatpush1.bf16.msra.mxu0 0
    %454 = vmatprep.subr.bf16.mxu0 0
    %455 = vmatpush1.bf16.msra.mxu0 0
    %456 = vmatprep.subr.bf16.mxu0 0
    %457 = vmatpush1.bf16.msra.mxu0 0
    %458 = vmatprep.mubr.bf16.mxu0 0
    %459 = vmatmul.mubr.bf16.gmra.mrb[0].mxu0 %v371
    %v460 = vpop.f32.mrb[0].mxu0
    %v461 = vadd.f32 %v376, %v460
    %v462 = vpop.f32.mrb[0].mxu0
    %v463 = vpop.f32.mrb[0].mxu0
    %v464 = vadd.f32 %v376, %v463
    %v465 = vpop.f32.mrb[0].mxu0
    %466 = vdwg.mxu0
    %467 = vst [vmem:[#allocation14] sm:$0xff] %v461
    %468 = vst [vmem:[#allocation14 + $0x8] sm:$0xff] %v464
    // Predicated region
    $region58: #{mlp_forward.1} parent=1 // pred_check
      _
    $region59: #{mlp_forward.1} parent=1 // pred_check_branch
      %470 = sbr.rel (0) target = $region61
    $region60: #{mlp_forward.1} parent=1 // pred_region
      %s472 = ssub.s32 256, 256
      %473 = vsyncadd [#allocation4], %s472
      %s474 = sshll.u32 [#allocation14], 4
      %s475 = int_to_ptr.vmem [resolvable:$true] %s474
      %480 = dma.vmem_to_hbm [thread:$0]  %s475, 256, %s7, [#allocation4], 128, 128, 8
    $region61: #{mlp_forward.1} parent=1 // pred_fallthru
      _
    // Predicated region
    $region62: #{mlp_forward.1} parent=1 // pred_check
      _
    $region63: #{mlp_forward.1} parent=1 // pred_check_branch
      %482 = sbr.rel (0) target = $region65
    $region64: #{mlp_forward.1} parent=1 // pred_region
      %483 = dma.done [#allocation4], 256
    $region65: #{mlp_forward.1} parent=1 // pred_fallthru
      _
    %484 = vsyncpa [#allocation3], 1
    %485 = vsyncpa [#allocation6], 1
    %486 = vsyncpa [#allocation9], 1
    %487 = vsyncpa [#allocation12], 1
    %488 = vsyncpa [#allocation4], 1

</llo_original>
